<compile_context>
chip_gen: v6e
topology: v6e:2x2x1
jax: 0.10.0
libtpu: 0.0.40
codegen_flags: <defaults>
</compile_context>

<pallas_src>
import functools

import jax
import jax.numpy as jnp
from jax import lax
from jax.experimental import pallas as pl
from jax.experimental.pallas import tpu as pltpu


_LANE = 128
_VMEM_TILE_BUDGET = 28 << 20      # keep the per-step footprint well inside v7x's 64 MiB


def _norm_rows(x):
    """F.normalize(dim=1): x / max(||x||_2, 1e-12), via rsqrt on the squared norm."""
    x = x.astype(jnp.float32)
    ss = jnp.sum(x * x, axis=1, keepdims=True)
    return x * lax.rsqrt(jnp.maximum(ss, 1e-24))


def _vmem_estimate(tile, d, in_itemsize):
    """Rough per-step VMEM footprint, used to cap the tile size."""
    tile_l = max(tile, _LANE)
    win_z = 4 * 2 * tile * d * in_itemsize      # 4 (tile, d) windows, double-buffered
    win_small = (2 + 4) * 8 * tile_l * 4        # pos window + lp window (sublane padded)
    scratch = 2 * 8 * tile_l * 4                # denom_i / denom_j accumulators
    temps = 10 * tile * tile * 4                # sim tiles + exp temporaries (headroom)
    return win_z + win_small + scratch + temps


def _choose_tiling(b, d, in_itemsize):
    """Return (padded batch, tile). Small batches run as a single tile."""
    if b <= _LANE:
        return b, b                             # block dims == full array dims: always legal
    b_pad = -(-b // _LANE) * _LANE              # pad to a lane multiple
    for t in (512, 256, 128):
        if (b_pad % t == 0 and b_pad // t >= 2  # >= 2 row tiles (v7x megacore)
                and _vmem_estimate(t, d, in_itemsize) <= _VMEM_TILE_BUDGET):
            return b_pad, t
    return b_pad, _LANE


def _ntxent_kernel(pos_ref, zi_r_ref, zj_r_ref, zi_c_ref, zj_c_ref,   # inputs
                   lp_ref,                                            # output (2, tile)
                   denom_i_ref, denom_j_ref,                          # VMEM scratch (1, tile)
                   *, inv_t, b_valid, b_pad):
    i = pl.program_id(0)            # row tile whose loss_partial we produce
    j = pl.program_id(1)            # streamed column tile (reduction axis)
    nc = pl.num_programs(1)

    @pl.when(j == 0)
    def _init():
        denom_i_ref[...] = jnp.zeros_like(denom_i_ref)
        denom_j_ref[...] = jnp.zeros_like(denom_j_ref)

    # Transposed, temperature-scaled similarity tiles (contract the lane /
    # feature axis of both operands -> MXU, no transpose of z):
    #   sim_xy[q, k] = (z_x[col q] / t) . z_y[row k]
    dn = (((1,), (1,)), ((), ()))
    dot = functools.partial(lax.dot_general, dimension_numbers=dn,
                            preferred_element_type=jnp.float32)
    zi_r, zj_r = zi_r_ref[...], zj_r_ref[...]
    zi_c, zj_c = zi_c_ref[...], zj_c_ref[...]
    sim_ii = dot(zi_c, zi_r)        # (tile_cols, tile_rows), f32
    sim_ij = dot(zi_c, zj_r)
    sim_ji = dot(zj_c, zi_r)
    sim_jj = dot(zj_c, zj_r)
    tc, tr = sim_ii.shape

    # Shifted exponents: exp(sim/t - 1/t); sim <= 1 so exponents are <= ~0
    # (safe for tiny temperatures, EUP does the exp).
    e_ii = jnp.exp(sim_ii - inv_t)
    e_ij = jnp.exp(sim_ij - inv_t)
    e_ji = jnp.exp(sim_ji - inv_t)
    e_jj = jnp.exp(sim_jj - inv_t)

    # Exclude self-similarity: only the ii/jj tiles on the j == i step contain
    # self pairs.  Masking (instead of subtracting exp(0) = 1 later) avoids the
    # log(S - 1) cancellation at small temperatures.
    r_idx = lax.broadcasted_iota(jnp.int32, (tc, tr), 0)
    c_idx = lax.broadcasted_iota(jnp.int32, (tc, tr), 1)
    not_self = jnp.where(jnp.logical_and(r_idx == c_idx, i == j), 0.0, 1.0)

    den_i = e_ii * not_self + e_ji          # columns hitting emb_i rows
    den_j = e_jj * not_self + e_ij          # columns hitting emb_j rows

    if b_valid < b_pad:                      # static: zero-padded batch rows present
        col = lax.broadcasted_iota(jnp.int32, (tc, 1), 0) + j * tc
        cmask = (col < b_valid).astype(jnp.float32)
        den_i = den_i * cmask
        den_j = den_j * cmask

    # Sublane (column) reductions -> lane-dense (1, tile) accumulators.
    denom_i_ref[...] += jnp.sum(den_i, axis=0, keepdims=True)
    denom_j_ref[...] += jnp.sum(den_j, axis=0, keepdims=True)

    @pl.when(j == nc - 1)
    def _finalize():
        # lp = -log(exp(pos/t) / sum_{q != k} exp(sim/t))
        #    = (1 - pos)/t + log(sum_{q != k} exp((sim - 1)/t))
        base = (1.0 - pos_ref[...]) * inv_t
        lp_ref[0:1, :] = base + jnp.log(denom_i_ref[...])
        lp_ref[1:2, :] = base + jnp.log(denom_j_ref[...])


def contrastive_loss(emb_i, emb_j, loss_emb=None, temperature=0.5,
                     matmul_dtype=jnp.bfloat16):
    b, d = emb_i.shape
    assert emb_j.shape == (b, d)
    n = 2 * b
    inv_t = float(1.0 / temperature)
    itemsize = jnp.dtype(matmul_dtype).itemsize
    b_pad, tile = _choose_tiling(b, d, itemsize)
    nr = nc = b_pad // tile

    # Hoisted once in the wrapper (reused by every streamed column-block fetch):
    # f32 normalization, temperature folded into the column operands, f32 positives.
    z_i = _norm_rows(emb_i)
    z_j = _norm_rows(emb_j)
    pos = jnp.sum(z_i * z_j, axis=1)[None, :]                  # (1, b), f32
    if b_pad != b:
        padn = b_pad - b
        z_i = jnp.pad(z_i, ((0, padn), (0, 0)))
        z_j = jnp.pad(z_j, ((0, padn), (0, 0)))
        pos = jnp.pad(pos, ((0, 0), (0, padn)))
    zr_i = z_i.astype(matmul_dtype)                            # row operands
    zr_j = z_j.astype(matmul_dtype)
    zc_i = (z_i * inv_t).astype(matmul_dtype)                  # column operands, 1/t folded
    zc_j = (z_j * inv_t).astype(matmul_dtype)

    kernel = functools.partial(_ntxent_kernel, inv_t=inv_t, b_valid=b, b_pad=b_pad)
    z_row_spec = pl.BlockSpec((tile, d), lambda i, j: (i, 0))
    z_col_spec = pl.BlockSpec((tile, d), lambda i, j: (j, 0))

    cost = pl.CostEstimate(
        flops=8 * b_pad * b_pad * d,
        transcendentals=4 * b_pad * b_pad,
        bytes_accessed=(nr + 1) * 2 * b_pad * d * itemsize + 3 * b_pad * 4,
    )
    vmem_limit = int(min(max(2 * _vmem_estimate(tile, d, itemsize), 32 << 20), 64 << 20))

    lp2 = pl.pallas_call(
        kernel,
        out_shape=jax.ShapeDtypeStruct((2, b_pad), jnp.float32),
        grid_spec=pltpu.PrefetchScalarGridSpec(
            num_scalar_prefetch=0,
            grid=(nr, nc),
            in_specs=[pl.BlockSpec((1, tile), lambda i, j: (0, i)),   # positives (f32)
                      z_row_spec, z_row_spec,                          # z_i / z_j rows
                      z_col_spec, z_col_spec],                         # (z_i/t) / (z_j/t) columns
            out_specs=pl.BlockSpec((2, tile), lambda i, j: (0, i)),
            scratch_shapes=[pltpu.VMEM((1, tile), jnp.float32),        # denom (emb_i rows)
                            pltpu.VMEM((1, tile), jnp.float32)],       # denom (emb_j rows)
        ),
        compiler_params=pltpu.CompilerParams(
            dimension_semantics=("parallel", "arbitrary"),
            vmem_limit_bytes=vmem_limit),
        cost_estimate=cost,
    )(pos, zr_i, zr_j, zc_i, zc_j)

    loss_partial = lp2[:, :b].reshape(n)        # [emb_i rows..., emb_j rows...]
    num = jnp.sum(lax.stop_gradient(loss_partial)) / n

    if loss_emb is not None:
        # Optional re-weighting branch: tiny elementwise glue, kept in plain JAX.
        w = loss_emb
        loss_w = jax.nn.softmax(-w / 1.0, axis=0) * w.shape[0]
        loss_w = jnp.where(loss_w > 1.0, loss_w, jnp.ones_like(loss_w))
        loss_w = lax.stop_gradient(loss_w)
        loss_partial = loss_partial * loss_w
        loss = jnp.sum(loss_partial) / jnp.sum(loss_w)
    else:
        loss = jnp.sum(loss_partial) / n

    return loss, loss_partial, num


def _reference(emb_i, emb_j, temperature=0.5):
    # Pure-JAX reference mirroring the PyTorch module (loss_emb=None path).
    def norm(x):
        return x / jnp.maximum(
            jnp.sqrt(jnp.sum(x * x, axis=1, keepdims=True)), 1e-12)

    b = emb_i.shape[0]
    n = 2 * b
    rep = jnp.concatenate([norm(emb_i), norm(emb_j)], axis=0)
    sim = jnp.matmul(rep, rep.T, precision=lax.Precision.HIGHEST)
    pos = jnp.concatenate([jnp.diagonal(sim, b), jnp.diagonal(sim, -b)], axis=0)
    mask = 1.0 - jnp.eye(n)
    denom = jnp.sum(mask * jnp.exp(sim / temperature), axis=1)
    lp = -jnp.log(jnp.exp(pos / temperature) / denom)
    return jnp.sum(lp) / n, lp, jnp.sum(lp) / n


if __name__ == "__main__":
    B, D = 8, 32
    key = jax.random.PRNGKey(0)
    ki, kj, kw = jax.random.split(key, 3)
    emb_i = jax.random.normal(ki, (B, D), dtype=jnp.float32)
    emb_j = jax.random.normal(kj, (B, D), dtype=jnp.float32)

    ref_loss, ref_lp, ref_num = _reference(emb_i, emb_j, temperature=0.5)

    # f32-operand MXU path: tight check against the reference.
    loss, lp, num = jax.block_until_ready(
        contrastive_loss(emb_i, emb_j, temperature=0.5, matmul_dtype=jnp.float32))
    assert jnp.allclose(loss, ref_loss, atol=1e-4, rtol=1e-4)
    assert jnp.allclose(lp, ref_lp, atol=1e-4, rtol=1e-4)
    assert jnp.allclose(num, ref_num, atol=1e-4, rtol=1e-4)

    # Default bf16-operand MXU path (f32 accumulation, f32 positives).
    loss_b, lp_b, num_b = jax.block_until_ready(
        contrastive_loss(emb_i, emb_j, temperature=0.5))
    assert jnp.allclose(loss_b, ref_loss, atol=3e-2, rtol=3e-2)
    assert jnp.allclose(lp_b, ref_lp, atol=3e-2, rtol=3e-2)

    # Tiled + padded multi-tile path (b not a multiple of the tile): exercises
    # the 2x2 grid, the padded-column mask and the per-tile self-exclusion.
    B2, D2 = 192, 64
    e2i = jax.random.normal(jax.random.PRNGKey(2), (B2, D2), dtype=jnp.float32)
    e2j = jax.random.normal(jax.random.PRNGKey(3), (B2, D2), dtype=jnp.float32)
    ref2_loss, ref2_lp, _ = _reference(e2i, e2j, temperature=0.5)
    loss2, lp2, _ = jax.block_until_ready(
        contrastive_loss(e2i, e2j, temperature=0.5, matmul_dtype=jnp.float32))
    assert lp2.shape == (2 * B2,)
    assert jnp.allclose(loss2, ref2_loss, atol=5e-4, rtol=5e-4)
    assert jnp.allclose(lp2, ref2_lp, atol=5e-4, rtol=5e-4)

    # Optional loss_emb re-weighting branch (wrapper-side glue).
    w = jnp.abs(jax.random.normal(kw, (2 * B,), jnp.float32))
    loss_w, lp_w, num_w = jax.block_until_ready(
        contrastive_loss(emb_i, emb_j, loss_emb=w, temperature=0.5,
                         matmul_dtype=jnp.float32))
    assert lp_w.shape == (2 * B,) and num_w.shape == ()

    print("KERNEL_OK")
</pallas_src>

<mosaic_0001>
module attributes {stable_mosaic.version = 11 : i64} {
  func.func @_ntxent_kernel(%arg0: i32, %arg1: i32, %arg2: memref<1x8xf32, #tpu.memory_space<vmem>>, %arg3: memref<8x32xf32, #tpu.memory_space<vmem>>, %arg4: memref<8x32xf32, #tpu.memory_space<vmem>>, %arg5: memref<8x32xf32, #tpu.memory_space<vmem>>, %arg6: memref<8x32xf32, #tpu.memory_space<vmem>>, %arg7: memref<2x8xf32, #tpu.memory_space<vmem>>, %arg8: memref<1x8xf32, #tpu.memory_space<vmem>>, %arg9: memref<1x8xf32, #tpu.memory_space<vmem>>) attributes {dimension_semantics = [#tpu.dimension_semantics<parallel>, #tpu.dimension_semantics<arbitrary>], iteration_bounds = array<i64: 1, 1>, scalar_prefetch = 0 : i64, scratch_operands = 2 : i64, tpu.core_type = #tpu.core_type<tc>, window_params = [{transform_indices = @transform_0, window_bounds = array<i64: 1, 8>}, {transform_indices = @transform_1, window_bounds = array<i64: 8, 32>}, {transform_indices = @transform_2, window_bounds = array<i64: 8, 32>}, {transform_indices = @transform_3, window_bounds = array<i64: 8, 32>}, {transform_indices = @transform_4, window_bounds = array<i64: 8, 32>}, {transform_indices = @transform_5, window_bounds = array<i64: 2, 8>}]} {
    %c0_i32 = arith.constant 0 : i32
    %0 = arith.cmpi eq, %arg1, %c0_i32 : i32
    %1 = arith.extui %0 : i1 to i32
    %c0_i32_0 = arith.constant 0 : i32
    %2 = arith.cmpi ne, %1, %c0_i32_0 : i32
    scf.if %2 {
      %cst_29 = arith.constant 0.000000e+00 : f32
      %49 = vector.broadcast %cst_29 : f32 to vector<1x8xf32>
      %c0_30 = arith.constant 0 : index
      %c0_31 = arith.constant 0 : index
      %50 = vector.load %arg8[%c0_30, %c0_31] : memref<1x8xf32, #tpu.memory_space<vmem>>, vector<1x8xf32>
      tpu.vector_store %arg8[%c0_30, %c0_31], %49 {strides = array<i32>} : memref<1x8xf32, #tpu.memory_space<vmem>>, vector<1x8xf32>,
      %cst_32 = arith.constant 0.000000e+00 : f32
      %51 = vector.broadcast %cst_32 : f32 to vector<1x8xf32>
      %c0_33 = arith.constant 0 : index
      %c0_34 = arith.constant 0 : index
      %52 = vector.load %arg9[%c0_33, %c0_34] : memref<1x8xf32, #tpu.memory_space<vmem>>, vector<1x8xf32>
      tpu.vector_store %arg9[%c0_33, %c0_34], %51 {strides = array<i32>} : memref<1x8xf32, #tpu.memory_space<vmem>>, vector<1x8xf32>,
    } else {
    }
    %c0 = arith.constant 0 : index
    %c0_1 = arith.constant 0 : index
    %3 = vector.load %arg3[%c0, %c0_1] : memref<8x32xf32, #tpu.memory_space<vmem>>, vector<8x32xf32>
    %c0_2 = arith.constant 0 : index
    %c0_3 = arith.constant 0 : index
    %4 = vector.load %arg4[%c0_2, %c0_3] : memref<8x32xf32, #tpu.memory_space<vmem>>, vector<8x32xf32>
    %c0_4 = arith.constant 0 : index
    %c0_5 = arith.constant 0 : index
    %5 = vector.load %arg5[%c0_4, %c0_5] : memref<8x32xf32, #tpu.memory_space<vmem>>, vector<8x32xf32>
    %c0_6 = arith.constant 0 : index
    %c0_7 = arith.constant 0 : index
    %6 = vector.load %arg6[%c0_6, %c0_7] : memref<8x32xf32, #tpu.memory_space<vmem>>, vector<8x32xf32>
    %cst = arith.constant dense<0.000000e+00> : vector<8x8xf32>
    %7 = tpu.matmul %5, %3, %cst {dimension_numbers = #tpu.dot_dimension_numbers<[1], [1], [0], [0], [0, 0, 1, 0], [], []>} : vector<8x32xf32>, vector<8x32xf32>, vector<8x8xf32> -> vector<8x8xf32>
    %cst_8 = arith.constant dense<0.000000e+00> : vector<8x8xf32>
    %8 = tpu.matmul %5, %4, %cst_8 {dimension_numbers = #tpu.dot_dimension_numbers<[1], [1], [0], [0], [0, 0, 1, 0], [], []>} : vector<8x32xf32>, vector<8x32xf32>, vector<8x8xf32> -> vector<8x8xf32>
    %cst_9 = arith.constant dense<0.000000e+00> : vector<8x8xf32>
    %9 = tpu.matmul %6, %3, %cst_9 {dimension_numbers = #tpu.dot_dimension_numbers<[1], [1], [0], [0], [0, 0, 1, 0], [], []>} : vector<8x32xf32>, vector<8x32xf32>, vector<8x8xf32> -> vector<8x8xf32>
    %cst_10 = arith.constant dense<0.000000e+00> : vector<8x8xf32>
    %10 = tpu.matmul %6, %4, %cst_10 {dimension_numbers = #tpu.dot_dimension_numbers<[1], [1], [0], [0], [0, 0, 1, 0], [], []>} : vector<8x32xf32>, vector<8x32xf32>, vector<8x8xf32> -> vector<8x8xf32>
    %cst_11 = arith.constant 2.000000e+00 : f32
    %11 = vector.broadcast %cst_11 : f32 to vector<8x8xf32>
    %12 = arith.subf %7, %11 : vector<8x8xf32>
    %13 = math.exp %12 : vector<8x8xf32>
    %cst_12 = arith.constant 2.000000e+00 : f32
    %14 = vector.broadcast %cst_12 : f32 to vector<8x8xf32>
    %15 = arith.subf %8, %14 : vector<8x8xf32>
    %16 = math.exp %15 : vector<8x8xf32>
    %cst_13 = arith.constant 2.000000e+00 : f32
    %17 = vector.broadcast %cst_13 : f32 to vector<8x8xf32>
    %18 = arith.subf %9, %17 : vector<8x8xf32>
    %19 = math.exp %18 : vector<8x8xf32>
    %cst_14 = arith.constant 2.000000e+00 : f32
    %20 = vector.broadcast %cst_14 : f32 to vector<8x8xf32>
    %21 = arith.subf %10, %20 : vector<8x8xf32>
    %22 = math.exp %21 : vector<8x8xf32>
    %23 = tpu.iota {dimensions = array<i32: 0>} : vector<8x8xi32>
    %24 = tpu.iota {dimensions = array<i32: 1>} : vector<8x8xi32>
    %25 = arith.cmpi eq, %23, %24 : vector<8x8xi32>
    %26 = arith.cmpi eq, %arg0, %arg1 : i32
    %27 = vector.broadcast %26 : i1 to vector<8x8xi1>
    %28 = arith.andi %25, %27 : vector<8x8xi1>
    %cst_15 = arith.constant 0.000000e+00 : f32
    %cst_16 = arith.constant 1.000000e+00 : f32
    %29 = vector.broadcast %cst_15 : f32 to vector<8x8xf32>
    %30 = vector.broadcast %cst_16 : f32 to vector<8x8xf32>
    %31 = arith.select %28, %29, %30 : vector<8x8xi1>, vector<8x8xf32>
    %32 = arith.mulf %13, %31 : vector<8x8xf32>
    %33 = arith.addf %32, %19 : vector<8x8xf32>
    %34 = arith.mulf %22, %31 : vector<8x8xf32>
    %35 = arith.addf %34, %16 : vector<8x8xf32>
    %c0_17 = arith.constant 0 : index
    %c0_18 = arith.constant 0 : index
    %36 = vector.load %arg8[%c0_17, %c0_18] : memref<1x8xf32, #tpu.memory_space<vmem>>, vector<1x8xf32>
    %cst_19 = arith.constant dense<0.000000e+00> : vector<8xf32>
    %37 = vector.multi_reduction <add>, %33, %cst_19 [0] : vector<8x8xf32> to vector<8xf32>
    %38 = vector.shape_cast %37 : vector<8xf32> to vector<1x8xf32>
    %39 = arith.addf %36, %38 : vector<1x8xf32>
    %c0_20 = arith.constant 0 : index
    %c0_21 = arith.constant 0 : index
    %40 = vector.load %arg8[%c0_20, %c0_21] : memref<1x8xf32, #tpu.memory_space<vmem>>, vector<1x8xf32>
    tpu.vector_store %arg8[%c0_20, %c0_21], %39 {strides = array<i32>} : memref<1x8xf32, #tpu.memory_space<vmem>>, vector<1x8xf32>,
    %c0_22 = arith.constant 0 : index
    %c0_23 = arith.constant 0 : index
    %41 = vector.load %arg9[%c0_22, %c0_23] : memref<1x8xf32, #tpu.memory_space<vmem>>, vector<1x8xf32>
    %cst_24 = arith.constant dense<0.000000e+00> : vector<8xf32>
    %42 = vector.multi_reduction <add>, %35, %cst_24 [0] : vector<8x8xf32> to vector<8xf32>
    %43 = vector.shape_cast %42 : vector<8xf32> to vector<1x8xf32>
    %44 = arith.addf %41, %43 : vector<1x8xf32>
    %c0_25 = arith.constant 0 : index
    %c0_26 = arith.constant 0 : index
    %45 = vector.load %arg9[%c0_25, %c0_26] : memref<1x8xf32, #tpu.memory_space<vmem>>, vector<1x8xf32>
    tpu.vector_store %arg9[%c0_25, %c0_26], %44 {strides = array<i32>} : memref<1x8xf32, #tpu.memory_space<vmem>>, vector<1x8xf32>,
    %c0_i32_27 = arith.constant 0 : i32
    %46 = arith.cmpi eq, %arg1, %c0_i32_27 : i32
    %47 = arith.extui %46 : i1 to i32
    %c0_i32_28 = arith.constant 0 : i32
    %48 = arith.cmpi ne, %47, %c0_i32_28 : i32
    scf.if %48 {
      %c0_29 = arith.constant 0 : index
      %c0_30 = arith.constant 0 : index
      %49 = vector.load %arg2[%c0_29, %c0_30] : memref<1x8xf32, #tpu.memory_space<vmem>>, vector<1x8xf32>
      %cst_31 = arith.constant 1.000000e+00 : f32
      %50 = vector.broadcast %cst_31 : f32 to vector<1x8xf32>
      %51 = arith.subf %50, %49 : vector<1x8xf32>
      %cst_32 = arith.constant 2.000000e+00 : f32
      %52 = vector.broadcast %cst_32 : f32 to vector<1x8xf32>
      %53 = arith.mulf %51, %52 : vector<1x8xf32>
      %c0_33 = arith.constant 0 : index
      %c0_34 = arith.constant 0 : index
      %54 = vector.load %arg8[%c0_33, %c0_34] : memref<1x8xf32, #tpu.memory_space<vmem>>, vector<1x8xf32>
      %55 = math.log %54 : vector<1x8xf32>
      %56 = arith.addf %53, %55 : vector<1x8xf32>
      %c0_35 = arith.constant 0 : index
      %c0_36 = arith.constant 0 : index
      %57 = vector.load %arg7[%c0_35, %c0_36] : memref<2x8xf32, #tpu.memory_space<vmem>>, vector<1x8xf32>
      tpu.vector_store %arg7[%c0_35, %c0_36], %56 {strides = array<i32>} : memref<2x8xf32, #tpu.memory_space<vmem>>, vector<1x8xf32>,
      %c0_37 = arith.constant 0 : index
      %c0_38 = arith.constant 0 : index
      %58 = vector.load %arg9[%c0_37, %c0_38] : memref<1x8xf32, #tpu.memory_space<vmem>>, vector<1x8xf32>
      %59 = math.log %58 : vector<1x8xf32>
      %60 = arith.addf %53, %59 : vector<1x8xf32>
      %c1 = arith.constant 1 : index
      %c0_39 = arith.constant 0 : index
      %61 = vector.load %arg7[%c1, %c0_39] : memref<2x8xf32, #tpu.memory_space<vmem>>, vector<1x8xf32>
      tpu.vector_store %arg7[%c1, %c0_39], %60 {strides = array<i32>} : memref<2x8xf32, #tpu.memory_space<vmem>>, vector<1x8xf32>,
    } else {
    }
    return
  }
  func.func @transform_0(%arg0: i32, %arg1: i32) -> (i32, i32) {
    %c0_i32 = arith.constant 0 : i32
    %c0_i32_0 = arith.constant 0 : i32
    return %c0_i32, %arg0 : i32, i32
  }
  func.func @transform_1(%arg0: i32, %arg1: i32) -> (i32, i32) {
    %c0_i32 = arith.constant 0 : i32
    %c0_i32_0 = arith.constant 0 : i32
    return %arg0, %c0_i32 : i32, i32
  }
  func.func @transform_2(%arg0: i32, %arg1: i32) -> (i32, i32) {
    %c0_i32 = arith.constant 0 : i32
    %c0_i32_0 = arith.constant 0 : i32
    return %arg0, %c0_i32 : i32, i32
  }
  func.func @transform_3(%arg0: i32, %arg1: i32) -> (i32, i32) {
    %c0_i32 = arith.constant 0 : i32
    %c0_i32_0 = arith.constant 0 : i32
    return %arg1, %c0_i32 : i32, i32
  }
  func.func @transform_4(%arg0: i32, %arg1: i32) -> (i32, i32) {
    %c0_i32 = arith.constant 0 : i32
    %c0_i32_0 = arith.constant 0 : i32
    return %arg1, %c0_i32 : i32, i32
  }
  func.func @transform_5(%arg0: i32, %arg1: i32) -> (i32, i32) {
    %c0_i32 = arith.constant 0 : i32
    %c0_i32_0 = arith.constant 0 : i32
    return %c0_i32, %arg0 : i32, i32
  }
}

</mosaic_0001>

<llo_original>
// kernel: tpu_custom_call.1
$region0: #{tpu_custom_call.1}
  #allocation0 [shape = 'u32[]', space=smem, size = 0x4, offset = 0x4, fixed_abs, tag = 'smem constant byte address 0x4 - core index']
  #allocation1 [shape = 'u32[144,128]{1,0:T(1,128)}', space=vmem, size = 0x12000, scoped, tag = 'internal scratch']
  #allocation2 [shape = 'f32[1,8]{1,0:T(1,128)}', space=vmem, size = 0x200, scoped, tag = 'scratch operand']
  #allocation3 [shape = 'f32[1,8]{1,0:T(1,128)}', space=vmem, size = 0x200, scoped, tag = 'scratch operand']
  %s0 = inlined_call_operand.hbm [shape: f32[1,8], index: 0, kind: input, shape index: {}]
  %s1 = inlined_call_operand.hbm [shape: f32[8,32], index: 1, kind: input, shape index: {}]
  %s2 = inlined_call_operand.hbm [shape: f32[8,32], index: 2, kind: input, shape index: {}]
  %s3 = inlined_call_operand.hbm [shape: f32[8,32], index: 3, kind: input, shape index: {}]
  %s4 = inlined_call_operand.hbm [shape: f32[8,32], index: 4, kind: input, shape index: {}]
  %s5 = inlined_call_operand.hbm [shape: f32[2,8], index: 5, kind: output, shape index: {}]
  %s6 = sld [smem:[#allocation0]]
  $region58: #{tpu_custom_call.1} parent=0
    _
  %s8 = ssub.s32 1, %s6
  %s9 = scalar_select 0, %s8, %s6
  $region1: #{tpu_custom_call.1} parent=0
    #allocation4 [shape = 'u8[512]{0}', space=vmem, size = 0x400, scoped, tag = 'input window, operand 0, single buffered']
    #allocation5 [shape = 's32[1]{0}', space=sflag, size = 0x4, scoped, tag = 'scoped memory for tpu_custom_call.1']
    #allocation6 [shape = 's32[1]{0}', space=sflag, size = 0x4, scoped, tag = 'scoped memory for tpu_custom_call.1']
    #allocation7 [shape = 'u8[4096]{0}', space=vmem, size = 0x1000, scoped, tag = 'input window, operand 1, single buffered']
    #allocation8 [shape = 's32[1]{0}', space=sflag, size = 0x4, scoped, tag = 'scoped memory for tpu_custom_call.1']
    #allocation9 [shape = 'u8[4096]{0}', space=vmem, size = 0x1000, scoped, tag = 'input window, operand 2, single buffered']
    #allocation10 [shape = 'u8[4096]{0}', space=vmem, size = 0x1000, scoped, tag = 'input window, operand 3, single buffered']
    #allocation11 [shape = 's32[1]{0}', space=sflag, size = 0x4, scoped, tag = 'scoped memory for tpu_custom_call.1']
    #allocation12 [shape = 'u8[4096]{0}', space=vmem, size = 0x1000, scoped, tag = 'input window, operand 4, single buffered']
    #allocation13 [shape = 'u8[1024]{0}', space=vmem, size = 0x400, scoped, tag = 'output window, operand 0, single buffered']
    %10 = vsyncpa [#allocation5], 0
    %11 = vsyncpa [#allocation8], 0
    %12 = vsyncpa [#allocation11], 0
    %13 = vsyncpa [#allocation6], 0
    // Predicated region
    $region2: #{tpu_custom_call.1} parent=1 // pred_check
      _
    $region3: #{tpu_custom_call.1} parent=1 // pred_check_branch
      %15 = sbr.rel (0) target = $region5
    $region4: #{tpu_custom_call.1} parent=1 // pred_region
      %s17 = ssub.s32 16, 16
      %18 = vsyncadd [#allocation5], %s17
      %s20 = sshll.u32 [#allocation4], 4
      %s21 = int_to_ptr.vmem [resolvable:$true] %s20
      %23 = dma.hbm_to_vmem [thread:$0]  %s0, 16, %s21, [#allocation5]
    $region5: #{tpu_custom_call.1} parent=1 // pred_fallthru
      _
    // Predicated region
    $region6: #{tpu_custom_call.1} parent=1 // pred_check
      _
    $region7: #{tpu_custom_call.1} parent=1 // pred_check_branch
      %25 = sbr.rel (0) target = $region9
    $region8: #{tpu_custom_call.1} parent=1 // pred_region
      %s27 = ssub.s32 128, 128
      %28 = vsyncadd [#allocation8], %s27
      %s30 = sshll.u32 [#allocation7], 4
      %s31 = int_to_ptr.vmem [resolvable:$true] %s30
      %33 = dma.hbm_to_vmem [thread:$0]  %s1, 128, %s31, [#allocation8]
    $region9: #{tpu_custom_call.1} parent=1 // pred_fallthru
      _
    // Predicated region
    $region10: #{tpu_custom_call.1} parent=1 // pred_check
      _
    $region11: #{tpu_custom_call.1} parent=1 // pred_check_branch
      %35 = sbr.rel (0) target = $region13
    $region12: #{tpu_custom_call.1} parent=1 // pred_region
      %s37 = ssub.s32 128, 128
      %38 = vsyncadd [#allocation8], %s37
      %s40 = sshll.u32 [#allocation9], 4
      %s41 = int_to_ptr.vmem [resolvable:$true] %s40
      %43 = dma.hbm_to_vmem [thread:$0]  %s2, 128, %s41, [#allocation8]
    $region13: #{tpu_custom_call.1} parent=1 // pred_fallthru
      _
    // Predicated region
    $region14: #{tpu_custom_call.1} parent=1 // pred_check
      _
    $region15: #{tpu_custom_call.1} parent=1 // pred_check_branch
      %45 = sbr.rel (0) target = $region17
    $region16: #{tpu_custom_call.1} parent=1 // pred_region
      %s47 = ssub.s32 128, 128
      %48 = vsyncadd [#allocation11], %s47
      %s50 = sshll.u32 [#allocation10], 4
      %s51 = int_to_ptr.vmem [resolvable:$true] %s50
      %53 = dma.hbm_to_vmem [thread:$0]  %s3, 128, %s51, [#allocation11]
    $region17: #{tpu_custom_call.1} parent=1 // pred_fallthru
      _
    // Predicated region
    $region18: #{tpu_custom_call.1} parent=1 // pred_check
      _
    $region19: #{tpu_custom_call.1} parent=1 // pred_check_branch
      %55 = sbr.rel (0) target = $region21
    $region20: #{tpu_custom_call.1} parent=1 // pred_region
      %s57 = ssub.s32 128, 128
      %58 = vsyncadd [#allocation11], %s57
      %s60 = sshll.u32 [#allocation12], 4
      %s61 = int_to_ptr.vmem [resolvable:$true] %s60
      %63 = dma.hbm_to_vmem [thread:$0]  %s4, 128, %s61, [#allocation11]
    $region21: #{tpu_custom_call.1} parent=1 // pred_fallthru
      _
    // Predicated region
    $region22: #{tpu_custom_call.1} parent=1 // pred_check
      _
    $region23: #{tpu_custom_call.1} parent=1 // pred_check_branch
      %65 = sbr.rel (0) target = $region25
    $region24: #{tpu_custom_call.1} parent=1 // pred_region
      %66 = dma.done [#allocation5], 16
    $region25: #{tpu_custom_call.1} parent=1 // pred_fallthru
      _
    // Predicated region
    $region26: #{tpu_custom_call.1} parent=1 // pred_check
      _
    $region27: #{tpu_custom_call.1} parent=1 // pred_check_branch
      %68 = sbr.rel (0) target = $region29
    $region28: #{tpu_custom_call.1} parent=1 // pred_region
      %69 = dma.done [#allocation8], 128
    $region29: #{tpu_custom_call.1} parent=1 // pred_fallthru
      _
    // Predicated region
    $region30: #{tpu_custom_call.1} parent=1 // pred_check
      _
    $region31: #{tpu_custom_call.1} parent=1 // pred_check_branch
      %71 = sbr.rel (0) target = $region33
    $region32: #{tpu_custom_call.1} parent=1 // pred_region
      %72 = dma.done [#allocation8], 128
    $region33: #{tpu_custom_call.1} parent=1 // pred_fallthru
      _
    // Predicated region
    $region34: #{tpu_custom_call.1} parent=1 // pred_check
      _
    $region35: #{tpu_custom_call.1} parent=1 // pred_check_branch
      %74 = sbr.rel (0) target = $region37
    $region36: #{tpu_custom_call.1} parent=1 // pred_region
      %75 = dma.done [#allocation11], 128
    $region37: #{tpu_custom_call.1} parent=1 // pred_fallthru
      _
    // Predicated region
    $region38: #{tpu_custom_call.1} parent=1 // pred_check
      _
    $region39: #{tpu_custom_call.1} parent=1 // pred_check_branch
      %77 = sbr.rel (0) target = $region41
    $region40: #{tpu_custom_call.1} parent=1 // pred_region
      %78 = dma.done [#allocation11], 128
    $region41: #{tpu_custom_call.1} parent=1 // pred_fallthru
      _
    %p79 = scmp.eq.s32.totalorder 0, 0
    // Predicated region
    $region42: #{tpu_custom_call.1} parent=1 // pred_check
      %p80 = pneg %p79
    $region43: #{tpu_custom_call.1} parent=1 // pred_check_branch
      %82 = sbr.rel (%p80) target = $region45
    $region44: #{tpu_custom_call.1} parent=1 // pred_region
      %vm83 = vcmask 57344
      %84 = vst.msk [vmem:[#allocation2] sm:$0x1] %vm83, 0.0
      %85 = vst.msk [vmem:[#allocation3] sm:$0x1] %vm83, 0.0
    $region45: #{tpu_custom_call.1} parent=1 // pred_fallthru
      _
    %v86 = vld [vmem:[#allocation7] sm:$0xff]
    %v87 = vld [vmem:[#allocation9] sm:$0xff]
    %v88 = vld [vmem:[#allocation10] sm:$0xff]
    %v89 = vld [vmem:[#allocation12] sm:$0xff]
    %vm90 = vcmask 261120
    %v92 = vsel %vm90, %v88, 0
    %v95 = vsel %vm90, %v86, 0
    %97 = vmatprep.subr.mxu0 0.0
    %98 = vmatpush1.xpose.msra.mxu0 0.0
    %99 = vmatprep.subr.mxu0 0.0
    %100 = vmatpush1.xpose.msra.mxu0 0.0
    %101 = vmatprep.subr.mxu0 0.0
    %102 = vmatpush1.xpose.msra.mxu0 0.0
    %103 = vmatprep.subr.mxu0 0.0
    %104 = vmatpush1.xpose.msra.mxu0 0.0
    %105 = vmatprep.subr.mxu0 0.0
    %106 = vmatpush1.xpose.msra.mxu0 0.0
    %107 = vmatprep.subr.mxu0 0.0
    %108 = vmatpush1.xpose.msra.mxu0 0.0
    %109 = vmatprep.subr.mxu0 0.0
    %110 = vmatpush1.xpose.msra.mxu0 0.0
    %111 = vmatprep.subr.mxu0 0.0
    %112 = vmatpush1.xpose.msra.mxu0 0.0
    %113 = vmatprep.subr.mxu0 0.0
    %114 = vmatpush1.xpose.msra.mxu0 0.0
    %115 = vmatprep.subr.mxu0 0.0
    %116 = vmatpush1.xpose.msra.mxu0 0.0
    %117 = vmatprep.subr.mxu0 0.0
    %118 = vmatpush1.xpose.msra.mxu0 0.0
    %119 = vmatprep.subr.mxu0 0.0
    %120 = vmatpush1.xpose.msra.mxu0 0.0
    %121 = vmatprep.subr.mxu0 0.0
    %122 = vmatpush1.xpose.msra.mxu0 0.0
    %123 = vmatprep.subr.mxu0 0.0
    %124 = vmatpush1.xpose.msra.mxu0 0.0
    %125 = vmatprep.subr.mxu0 0.0
    %126 = vmatpush1.xpose.msra.mxu0 0.0
    %127 = vmatprep.subr.mxu0 0.0
    %128 = vmatpush1.xpose.msra.mxu0 %v95
    %129 = vmatprep.subr.mxu0 0.0
    %130 = vmatpush2.xpose.msra.mxu0 0.0
    %131 = vmatprep.subr.mxu0 0.0
    %132 = vmatpush2.xpose.msra.mxu0 0.0
    %133 = vmatprep.subr.mxu0 0.0
    %134 = vmatpush2.xpose.msra.mxu0 0.0
    %135 = vmatprep.subr.mxu0 0.0
    %136 = vmatpush2.xpose.msra.mxu0 0.0
    %137 = vmatprep.subr.mxu0 0.0
    %138 = vmatpush2.xpose.msra.mxu0 0.0
    %139 = vmatprep.subr.mxu0 0.0
    %140 = vmatpush2.xpose.msra.mxu0 0.0
    %141 = vmatprep.subr.mxu0 0.0
    %142 = vmatpush2.xpose.msra.mxu0 0.0
    %143 = vmatprep.subr.mxu0 0.0
    %144 = vmatpush2.xpose.msra.mxu0 0.0
    %145 = vmatprep.subr.mxu0 0.0
    %146 = vmatpush2.xpose.msra.mxu0 0.0
    %147 = vmatprep.subr.mxu0 0.0
    %148 = vmatpush2.xpose.msra.mxu0 0.0
    %149 = vmatprep.subr.mxu0 0.0
    %150 = vmatpush2.xpose.msra.mxu0 0.0
    %151 = vmatprep.subr.mxu0 0.0
    %152 = vmatpush2.xpose.msra.mxu0 0.0
    %153 = vmatprep.subr.mxu0 0.0
    %154 = vmatpush2.xpose.msra.mxu0 0.0
    %155 = vmatprep.subr.mxu0 0.0
    %156 = vmatpush2.xpose.msra.mxu0 0.0
    %157 = vmatprep.subr.mxu0 0.0
    %158 = vmatpush2.xpose.msra.mxu0 0.0
    %159 = vmatprep.subr.mxu0 0.0
    %160 = vmatpush2.xpose.msra.mxu0 0.0
    %161 = vmatprep.mubr.f32.mxu0 0.0
    %162 = vmatmul.mubr.f32.gmra.mxu0 %v92
    %v163 = vpop.f32.mrf.mxu0
    %v164 = vadd.f32 0.0, %v163
    %v165 = vpop.f32.mrf.mxu0
    %166 = vdwg.mxu0
    %v168 = vsel %vm90, %v87, 0
    %170 = vmatprep.subr.mxu0 0.0
    %171 = vmatpush1.xpose.msra.mxu0 0.0
    %172 = vmatprep.subr.mxu0 0.0
    %173 = vmatpush1.xpose.msra.mxu0 0.0
    %174 = vmatprep.subr.mxu0 0.0
    %175 = vmatpush1.xpose.msra.mxu0 0.0
    %176 = vmatprep.subr.mxu0 0.0
    %177 = vmatpush1.xpose.msra.mxu0 0.0
    %178 = vmatprep.subr.mxu0 0.0
    %179 = vmatpush1.xpose.msra.mxu0 0.0
    %180 = vmatprep.subr.mxu0 0.0
    %181 = vmatpush1.xpose.msra.mxu0 0.0
    %182 = vmatprep.subr.mxu0 0.0
    %183 = vmatpush1.xpose.msra.mxu0 0.0
    %184 = vmatprep.subr.mxu0 0.0
    %185 = vmatpush1.xpose.msra.mxu0 0.0
    %186 = vmatprep.subr.mxu0 0.0
    %187 = vmatpush1.xpose.msra.mxu0 0.0
    %188 = vmatprep.subr.mxu0 0.0
    %189 = vmatpush1.xpose.msra.mxu0 0.0
    %190 = vmatprep.subr.mxu0 0.0
    %191 = vmatpush1.xpose.msra.mxu0 0.0
    %192 = vmatprep.subr.mxu0 0.0
    %193 = vmatpush1.xpose.msra.mxu0 0.0
    %194 = vmatprep.subr.mxu0 0.0
    %195 = vmatpush1.xpose.msra.mxu0 0.0
    %196 = vmatprep.subr.mxu0 0.0
    %197 = vmatpush1.xpose.msra.mxu0 0.0
    %198 = vmatprep.subr.mxu0 0.0
    %199 = vmatpush1.xpose.msra.mxu0 0.0
    %200 = vmatprep.subr.mxu0 0.0
    %201 = vmatpush1.xpose.msra.mxu0 %v168
    %202 = vmatprep.subr.mxu0 0.0
    %203 = vmatpush2.xpose.msra.mxu0 0.0
    %204 = vmatprep.subr.mxu0 0.0
    %205 = vmatpush2.xpose.msra.mxu0 0.0
    %206 = vmatprep.subr.mxu0 0.0
    %207 = vmatpush2.xpose.msra.mxu0 0.0
    %208 = vmatprep.subr.mxu0 0.0
    %209 = vmatpush2.xpose.msra.mxu0 0.0
    %210 = vmatprep.subr.mxu0 0.0
    %211 = vmatpush2.xpose.msra.mxu0 0.0
    %212 = vmatprep.subr.mxu0 0.0
    %213 = vmatpush2.xpose.msra.mxu0 0.0
    %214 = vmatprep.subr.mxu0 0.0
    %215 = vmatpush2.xpose.msra.mxu0 0.0
    %216 = vmatprep.subr.mxu0 0.0
    %217 = vmatpush2.xpose.msra.mxu0 0.0
    %218 = vmatprep.subr.mxu0 0.0
    %219 = vmatpush2.xpose.msra.mxu0 0.0
    %220 = vmatprep.subr.mxu0 0.0
    %221 = vmatpush2.xpose.msra.mxu0 0.0
    %222 = vmatprep.subr.mxu0 0.0
    %223 = vmatpush2.xpose.msra.mxu0 0.0
    %224 = vmatprep.subr.mxu0 0.0
    %225 = vmatpush2.xpose.msra.mxu0 0.0
    %226 = vmatprep.subr.mxu0 0.0
    %227 = vmatpush2.xpose.msra.mxu0 0.0
    %228 = vmatprep.subr.mxu0 0.0
    %229 = vmatpush2.xpose.msra.mxu0 0.0
    %230 = vmatprep.subr.mxu0 0.0
    %231 = vmatpush2.xpose.msra.mxu0 0.0
    %232 = vmatprep.subr.mxu0 0.0
    %233 = vmatpush2.xpose.msra.mxu0 0.0
    %234 = vmatprep.mubr.f32.mxu0 0.0
    %235 = vmatmul.mubr.f32.gmra.mxu0 %v92
    %v236 = vpop.f32.mrf.mxu0
    %v237 = vadd.f32 0.0, %v236
    %v238 = vpop.f32.mrf.mxu0
    %239 = vdwg.mxu0
    %v241 = vsel %vm90, %v89, 0
    %243 = vmatprep.subr.mxu0 0.0
    %244 = vmatpush1.xpose.msra.mxu0 0.0
    %245 = vmatprep.subr.mxu0 0.0
    %246 = vmatpush1.xpose.msra.mxu0 0.0
    %247 = vmatprep.subr.mxu0 0.0
    %248 = vmatpush1.xpose.msra.mxu0 0.0
    %249 = vmatprep.subr.mxu0 0.0
    %250 = vmatpush1.xpose.msra.mxu0 0.0
    %251 = vmatprep.subr.mxu0 0.0
    %252 = vmatpush1.xpose.msra.mxu0 0.0
    %253 = vmatprep.subr.mxu0 0.0
    %254 = vmatpush1.xpose.msra.mxu0 0.0
    %255 = vmatprep.subr.mxu0 0.0
    %256 = vmatpush1.xpose.msra.mxu0 0.0
    %257 = vmatprep.subr.mxu0 0.0
    %258 = vmatpush1.xpose.msra.mxu0 0.0
    %259 = vmatprep.subr.mxu0 0.0
    %260 = vmatpush1.xpose.msra.mxu0 0.0
    %261 = vmatprep.subr.mxu0 0.0
    %262 = vmatpush1.xpose.msra.mxu0 0.0
    %263 = vmatprep.subr.mxu0 0.0
    %264 = vmatpush1.xpose.msra.mxu0 0.0
    %265 = vmatprep.subr.mxu0 0.0
    %266 = vmatpush1.xpose.msra.mxu0 0.0
    %267 = vmatprep.subr.mxu0 0.0
    %268 = vmatpush1.xpose.msra.mxu0 0.0
    %269 = vmatprep.subr.mxu0 0.0
    %270 = vmatpush1.xpose.msra.mxu0 0.0
    %271 = vmatprep.subr.mxu0 0.0
    %272 = vmatpush1.xpose.msra.mxu0 0.0
    %273 = vmatprep.subr.mxu0 0.0
    %274 = vmatpush1.xpose.msra.mxu0 %v95
    %275 = vmatprep.subr.mxu0 0.0
    %276 = vmatpush2.xpose.msra.mxu0 0.0
    %277 = vmatprep.subr.mxu0 0.0
    %278 = vmatpush2.xpose.msra.mxu0 0.0
    %279 = vmatprep.subr.mxu0 0.0
    %280 = vmatpush2.xpose.msra.mxu0 0.0
    %281 = vmatprep.subr.mxu0 0.0
    %282 = vmatpush2.xpose.msra.mxu0 0.0
    %283 = vmatprep.subr.mxu0 0.0
    %284 = vmatpush2.xpose.msra.mxu0 0.0
    %285 = vmatprep.subr.mxu0 0.0
    %286 = vmatpush2.xpose.msra.mxu0 0.0
    %287 = vmatprep.subr.mxu0 0.0
    %288 = vmatpush2.xpose.msra.mxu0 0.0
    %289 = vmatprep.subr.mxu0 0.0
    %290 = vmatpush2.xpose.msra.mxu0 0.0
    %291 = vmatprep.subr.mxu0 0.0
    %292 = vmatpush2.xpose.msra.mxu0 0.0
    %293 = vmatprep.subr.mxu0 0.0
    %294 = vmatpush2.xpose.msra.mxu0 0.0
    %295 = vmatprep.subr.mxu0 0.0
    %296 = vmatpush2.xpose.msra.mxu0 0.0
    %297 = vmatprep.subr.mxu0 0.0
    %298 = vmatpush2.xpose.msra.mxu0 0.0
    %299 = vmatprep.subr.mxu0 0.0
    %300 = vmatpush2.xpose.msra.mxu0 0.0
    %301 = vmatprep.subr.mxu0 0.0
    %302 = vmatpush2.xpose.msra.mxu0 0.0
    %303 = vmatprep.subr.mxu0 0.0
    %304 = vmatpush2.xpose.msra.mxu0 0.0
    %305 = vmatprep.subr.mxu0 0.0
    %306 = vmatpush2.xpose.msra.mxu0 0.0
    %307 = vmatprep.mubr.f32.mxu0 0.0
    %308 = vmatmul.mubr.f32.gmra.mxu0 %v241
    %v309 = vpop.f32.mrf.mxu0
    %v310 = vadd.f32 0.0, %v309
    %v311 = vpop.f32.mrf.mxu0
    %312 = vdwg.mxu0
    %313 = vmatprep.subr.mxu0 0.0
    %314 = vmatpush1.xpose.msra.mxu0 0.0
    %315 = vmatprep.subr.mxu0 0.0
    %316 = vmatpush1.xpose.msra.mxu0 0.0
    %317 = vmatprep.subr.mxu0 0.0
    %318 = vmatpush1.xpose.msra.mxu0 0.0
    %319 = vmatprep.subr.mxu0 0.0
    %320 = vmatpush1.xpose.msra.mxu0 0.0
    %321 = vmatprep.subr.mxu0 0.0
    %322 = vmatpush1.xpose.msra.mxu0 0.0
    %323 = vmatprep.subr.mxu0 0.0
    %324 = vmatpush1.xpose.msra.mxu0 0.0
    %325 = vmatprep.subr.mxu0 0.0
    %326 = vmatpush1.xpose.msra.mxu0 0.0
    %327 = vmatprep.subr.mxu0 0.0
    %328 = vmatpush1.xpose.msra.mxu0 0.0
    %329 = vmatprep.subr.mxu0 0.0
    %330 = vmatpush1.xpose.msra.mxu0 0.0
    %331 = vmatprep.subr.mxu0 0.0
    %332 = vmatpush1.xpose.msra.mxu0 0.0
    %333 = vmatprep.subr.mxu0 0.0
    %334 = vmatpush1.xpose.msra.mxu0 0.0
    %335 = vmatprep.subr.mxu0 0.0
    %336 = vmatpush1.xpose.msra.mxu0 0.0
    %337 = vmatprep.subr.mxu0 0.0
    %338 = vmatpush1.xpose.msra.mxu0 0.0
    %339 = vmatprep.subr.mxu0 0.0
    %340 = vmatpush1.xpose.msra.mxu0 0.0
    %341 = vmatprep.subr.mxu0 0.0
    %342 = vmatpush1.xpose.msra.mxu0 0.0
    %343 = vmatprep.subr.mxu0 0.0
    %344 = vmatpush1.xpose.msra.mxu0 %v168
    %345 = vmatprep.subr.mxu0 0.0
    %346 = vmatpush2.xpose.msra.mxu0 0.0
    %347 = vmatprep.subr.mxu0 0.0
    %348 = vmatpush2.xpose.msra.mxu0 0.0
    %349 = vmatprep.subr.mxu0 0.0
    %350 = vmatpush2.xpose.msra.mxu0 0.0
    %351 = vmatprep.subr.mxu0 0.0
    %352 = vmatpush2.xpose.msra.mxu0 0.0
    %353 = vmatprep.subr.mxu0 0.0
    %354 = vmatpush2.xpose.msra.mxu0 0.0
    %355 = vmatprep.subr.mxu0 0.0
    %356 = vmatpush2.xpose.msra.mxu0 0.0
    %357 = vmatprep.subr.mxu0 0.0
    %358 = vmatpush2.xpose.msra.mxu0 0.0
    %359 = vmatprep.subr.mxu0 0.0
    %360 = vmatpush2.xpose.msra.mxu0 0.0
    %361 = vmatprep.subr.mxu0 0.0
    %362 = vmatpush2.xpose.msra.mxu0 0.0
    %363 = vmatprep.subr.mxu0 0.0
    %364 = vmatpush2.xpose.msra.mxu0 0.0
    %365 = vmatprep.subr.mxu0 0.0
    %366 = vmatpush2.xpose.msra.mxu0 0.0
    %367 = vmatprep.subr.mxu0 0.0
    %368 = vmatpush2.xpose.msra.mxu0 0.0
    %369 = vmatprep.subr.mxu0 0.0
    %370 = vmatpush2.xpose.msra.mxu0 0.0
    %371 = vmatprep.subr.mxu0 0.0
    %372 = vmatpush2.xpose.msra.mxu0 0.0
    %373 = vmatprep.subr.mxu0 0.0
    %374 = vmatpush2.xpose.msra.mxu0 0.0
    %375 = vmatprep.subr.mxu0 0.0
    %376 = vmatpush2.xpose.msra.mxu0 0.0
    %377 = vmatprep.mubr.f32.mxu0 0.0
    %378 = vmatmul.mubr.f32.gmra.mxu0 %v241
    %v379 = vpop.f32.mrf.mxu0
    %v380 = vadd.f32 0.0, %v379
    %v381 = vpop.f32.mrf.mxu0
    %382 = vdwg.mxu0
    %v383 = vsub.f32 %v164, 2.0
    %v384 = vmul.f32 %v383, 1.442695
    %v385 = vpow.pop %v384
    %v386 = vsub.f32 %v237, 2.0
    %v387 = vmul.f32 %v386, 1.442695
    %v388 = vpow.pop %v387
    %v389 = vsub.f32 %v310, 2.0
    %v390 = vmul.f32 %v389, 1.442695
    %v391 = vpow.pop %v390
    %v392 = vsub.f32 %v380, 2.0
    %v393 = vmul.f32 %v392, 1.442695
    %v394 = vpow.pop %v393
    %v395 = vlaneseq
    %v396 = vshrl.u32 %v395, 7
    %v397 = vlaneseq
    %v398 = vand.u32 %v397, 127
    %vm399 = vcmp.eq.s32.totalorder %v396, %v398
    %p400 = scmp.eq.s32.totalorder 0, 0
    %s401 = scalar_select %p400, 1, 0
    %v402 = vstv %s401
    %vm403 = vcmp.eq.s32.totalorder %v402, 1
    %vm404 = vmand %vm399, %vm403
    %v405 = vsel %vm404, 0.0, 1.0
    %v406 = vmul.f32 %v385, %v405
    %v407 = vadd.f32 %v406, %v391
    %v408 = vmul.f32 %v394, %v405
    %v409 = vadd.f32 %v408, %v388
    %v410 = vld [vmem:[#allocation2] sm:$0x1]
    %vm411 = vcmask 64512
    %v412 = vsel %vm411, %v407, 0.0
    %v413 = vrot.slane %v412, 4
    %v414 = vadd.f32 %v412, %v413
    %v415 = vrot.slane %v414, 2
    %v416 = vadd.f32 %v414, %v415
    %v417 = vrot.slane %v416, 1
    %v418 = vadd.f32 %v416, %v417
    %v419 = vadd.f32 %v410, %v418
    %vm420 = vcmask 57344
    %421 = vst.msk [vmem:[#allocation2] sm:$0x1] %vm420, %v419
    %v422 = vld [vmem:[#allocation3] sm:$0x1]
    %v423 = vsel %vm411, %v409, 0.0
    %v424 = vrot.slane %v423, 4
    %v425 = vadd.f32 %v423, %v424
    %v426 = vrot.slane %v425, 2
    %v427 = vadd.f32 %v425, %v426
    %v428 = vrot.slane %v427, 1
    %v429 = vadd.f32 %v427, %v428
    %v430 = vadd.f32 %v422, %v429
    %431 = vst.msk [vmem:[#allocation3] sm:$0x1] %vm420, %v430
    // Predicated region
    $region46: #{tpu_custom_call.1} parent=1 // pred_check
      %p432 = pneg %p79
    $region47: #{tpu_custom_call.1} parent=1 // pred_check_branch
      %434 = sbr.rel (%p432) target = $region49
    $region48: #{tpu_custom_call.1} parent=1 // pred_region
      %v435 = vld [vmem:[#allocation4] sm:$0x1]
      %v436 = vsub.f32 1.0, %v435
      %v437 = vmul.f32 %v436, 2.0
      %v438 = vld [vmem:[#allocation2] sm:$0x1]
      %v439 = vlog2.pop %v438
      %v440 = vmul.f32 %v439, 0.6931472
      %v441 = vadd.f32 %v437, %v440
      %442 = vst.msk [vmem:[#allocation13] sm:$0x1] %vm420, %v441
      %v443 = vld [vmem:[#allocation3] sm:$0x1]
      %v444 = vlog2.pop %v443
      %v445 = vmul.f32 %v444, 0.6931472
      %v446 = vadd.f32 %v437, %v445
      %447 = vst.msk [vmem:[#allocation13 + $0x1] sm:$0x1] %vm420, %v446
    $region49: #{tpu_custom_call.1} parent=1 // pred_fallthru
      _
    // Predicated region
    $region50: #{tpu_custom_call.1} parent=1 // pred_check
      _
    $region51: #{tpu_custom_call.1} parent=1 // pred_check_branch
      %449 = sbr.rel (0) target = $region53
    $region52: #{tpu_custom_call.1} parent=1 // pred_region
      %s451 = ssub.s32 32, 32
      %452 = vsyncadd [#allocation6], %s451
      %s454 = sshll.u32 [#allocation13], 4
      %s455 = int_to_ptr.vmem [resolvable:$true] %s454
      %457 = dma.vmem_to_hbm [thread:$0]  %s455, 32, %s5, [#allocation6]
    $region53: #{tpu_custom_call.1} parent=1 // pred_fallthru
      _
    // Predicated region
    $region54: #{tpu_custom_call.1} parent=1 // pred_check
      _
    $region55: #{tpu_custom_call.1} parent=1 // pred_check_branch
      %459 = sbr.rel (0) target = $region57
    $region56: #{tpu_custom_call.1} parent=1 // pred_region
      %460 = dma.done [#allocation6], 32
    $region57: #{tpu_custom_call.1} parent=1 // pred_fallthru
      _
    %461 = vsyncpa [#allocation5], 1
    %462 = vsyncpa [#allocation8], 1
    %463 = vsyncpa [#allocation11], 1
    %464 = vsyncpa [#allocation6], 1

</llo_original>
